<compile_context>
chip_gen: v6e
topology: v6e:2x2x1
jax: 0.10.0
libtpu: 0.0.40
codegen_flags: <defaults>
</compile_context>

<pallas_src>
import functools

import jax
import jax.numpy as jnp
from jax.experimental import pallas as pl
from jax.experimental.pallas import tpu as pltpu


# ----------------------------- fused kernel --------------------------------
def _stacked_kernel(x_ref, shift_ref, *rest, num_convs, B, H, neg_slope,
                    compute_dtype):
    """Fused StackedConvLayers forward for a block of B stacked images.

    x_ref     : (B*H, W*Cin)         lane-dense activation slab (compute_dtype)
    shift_ref : (num_convs, W*Cout)  per-layer folded bias/BN shift rows (f32)
    rest      : w_0 ... w_{L-1}      banded weights, layer l: (3, W*C_l, W*Cout)
                o_ref                (B*H, W*Cout) f32 output slab
    """
    w_refs = rest[:num_convs]
    o_ref = rest[num_convs]
    BH = B * H

    # Rows that must NOT receive the "row above" / "row below" tap: the top /
    # bottom row of every image in the stacked block (== vertical SAME padding).
    row = jax.lax.broadcasted_iota(jnp.int32, (BH, 1), 0)
    no_above = (row % H) == 0
    no_below = (row % H) == (H - 1)

    x = x_ref[...]                                   # (B*H, W*C_in)
    for l in range(num_convs):
        w = w_refs[l]                                # (3, W*C_l, W*C_out)
        # Three full-height MXU dots per layer; acc starts as the centre tap
        # (no zeros-init + add).
        acc = jnp.dot(x, w[1], preferred_element_type=jnp.float32)
        c0 = jnp.dot(x, w[0], preferred_element_type=jnp.float32)
        c2 = jnp.dot(x, w[2], preferred_element_type=jnp.float32)
        # out row r needs c0[r-1] and c2[r+1]; circular sublane rotation (XLU)
        # + boundary-row masking (VPU) implements the shift with zero padding.
        above = pltpu.roll(c0, shift=1, axis=0)            # above[r] = c0[r-1]
        below = pltpu.roll(c2, shift=BH - 1, axis=0)       # below[r] = c2[r+1]
        acc = acc + jnp.where(no_above, 0.0, above) + jnp.where(no_below, 0.0, below)
        # Dropout2d(eval)=identity; conv bias + eval BN folded into one shift
        # row (BN scale already folded into the banded weights).
        y = acc + shift_ref[l:l + 1, :]
        y = jnp.maximum(y, neg_slope * y)                  # LeakyReLU(0.01)
        if l == num_convs - 1:
            o_ref[...] = y.astype(o_ref.dtype)             # lane-dense output
        else:
            x = y.astype(compute_dtype)                    # stays in vregs


# ----------------------------- preprocessing -------------------------------
def _banded_weights(w_hwio, W):
    """Fold 3x3 conv (SAME, pad=1) into 3 banded matrices of shape (W*Cin, W*Cout).

    B[dy][(w+dx-1)*Cin + ci, w*Cout + co] = w_hwio[dy, dx, ci, co]
    for 0 <= w+dx-1 < W; out-of-range taps are dropped (== horizontal zero pad).
    """
    KH, KW, Cin, Cout = w_hwio.shape
    bands = []
    for dy in range(KH):
        b = jnp.zeros((W * Cin, W * Cout), jnp.float32)
        for dx in range(KW):
            e = jnp.eye(W, k=1 - dx, dtype=jnp.float32)      # col = row + (1-dx)
            b = b + jnp.einsum("rc,io->rico", e,
                               w_hwio[dy, dx]).reshape(W * Cin, W * Cout)
        bands.append(b)
    return jnp.stack(bands)                                  # (3, W*Cin, W*Cout)


def prepare_stacked_conv_params(params, W, eps=1e-5, compute_dtype=jnp.bfloat16):
    """One-time weight preprocessing (hoist out of the per-call path).

    Folds eval-BatchNorm scale into the banded conv weights and conv bias +
    BN shift into a per-channel shift row.  compute_dtype=bfloat16 is the
    performance setting for v6e/v7x; float32 preserves exact eval numerics.
    """
    bands, shifts = [], []
    for p in params:
        scale = p["gamma"] / jnp.sqrt(p["run_var"] + eps)          # (Cout,)
        shift = p["beta"] + (p["b"] - p["run_mean"]) * scale       # (Cout,)
        w_scaled = p["w"].astype(jnp.float32) * scale              # fold BN scale
        bands.append(_banded_weights(w_scaled, W).astype(compute_dtype))
        shifts.append(jnp.tile(shift.astype(jnp.float32), W))      # lane = w*Cout+co
    return {"bands": bands, "shifts": jnp.stack(shifts),
            "compute_dtype": compute_dtype}


def _choose_images_per_block(N, H, target_rows=256, min_rows=128):
    """Largest divisor B of N with B*H <= target_rows; prefer >=2 grid steps
    (megacore) when that keeps B*H >= min_rows."""
    b = 1
    for cand in range(1, N + 1):
        if N % cand == 0 and cand * H <= target_rows:
            b = cand
    while (N // b) < 2 and b > 1 and b % 2 == 0 and (b // 2) * H >= min_rows \
            and N % (b // 2) == 0:
        b //= 2
    return b


# ----------------------------- forward wrappers ----------------------------
def stacked_conv_layers_forward_slab(x_slab, prepared, *, H, neg_slope=0.01,
                                     images_per_block=None):
    """Forward on lane-dense slabs: (N*H, W*Cin) -> (N*H, W*Cout)."""
    bands = prepared["bands"]
    shifts = prepared["shifts"]
    compute_dtype = prepared["compute_dtype"]
    num_convs = len(bands)
    NH, WCin = x_slab.shape
    N = NH // H
    WCout = bands[-1].shape[-1]

    B = images_per_block if images_per_block is not None else \
        _choose_images_per_block(N, H)
    grid = (N // B,)

    kernel = functools.partial(_stacked_kernel, num_convs=num_convs, B=B, H=H,
                               neg_slope=neg_slope, compute_dtype=compute_dtype)

    in_specs = [
        pl.BlockSpec((B * H, WCin), lambda n: (n, 0)),
        pl.BlockSpec(shifts.shape, lambda n: (0, 0)),
    ] + [pl.BlockSpec(wb.shape, lambda n: (0, 0, 0)) for wb in bands]

    out = pl.pallas_call(
        kernel,
        out_shape=jax.ShapeDtypeStruct((NH, WCout), jnp.float32),
        grid=grid,
        in_specs=in_specs,
        out_specs=pl.BlockSpec((B * H, WCout), lambda n: (n, 0)),
        compiler_params=pltpu.CompilerParams(
            dimension_semantics=("parallel",),
            vmem_limit_bytes=32 * 1024 * 1024),
    )(x_slab.astype(compute_dtype), shifts, *bands)
    return out


def stacked_conv_layers_forward(x_nchw, prepared, neg_slope=0.01,
                                images_per_block=None):
    """StackedConvLayers.forward with NCHW in/out (layout plumbing only)."""
    N, Cin, H, W = x_nchw.shape
    WCout = prepared["shifts"].shape[-1]
    Cout = WCout // W
    x_slab = jnp.transpose(x_nchw, (0, 2, 3, 1)).reshape(N * H, W * Cin)
    out = stacked_conv_layers_forward_slab(x_slab, prepared, H=H,
                                           neg_slope=neg_slope,
                                           images_per_block=images_per_block)
    return jnp.transpose(out.reshape(N, H, W, Cout), (0, 3, 1, 2))


# ----------------------------- parameter init ------------------------------
def init_stacked_conv_params(key, input_channels, output_channels, num_convs):
    """Deterministic parameter init matching StackedConvLayers shapes."""
    params = []
    cin = input_channels
    for _ in range(num_convs):
        key, kw, kb, kg, kbt, km, kv = jax.random.split(key, 7)
        w_oihw = 0.1 * jax.random.normal(kw, (output_channels, cin, 3, 3),
                                         jnp.float32)
        params.append(dict(
            w=jnp.transpose(w_oihw, (2, 3, 1, 0)),   # HWIO
            b=0.05 * jax.random.normal(kb, (output_channels,), jnp.float32),
            gamma=1.0 + 0.1 * jax.random.normal(kg, (output_channels,),
                                                jnp.float32),
            beta=0.05 * jax.random.normal(kbt, (output_channels,), jnp.float32),
            run_mean=0.1 * jax.random.normal(km, (output_channels,),
                                             jnp.float32),
            run_var=jax.random.uniform(kv, (output_channels,), jnp.float32,
                                       0.5, 1.5),
        ))
        cin = output_channels
    return params


# ----------------------------- reference (plain JAX) ------------------------
def _ref_block(x_nhwc, p, eps=1e-5, neg_slope=0.01):
    y = jax.lax.conv_general_dilated(
        x_nhwc, p["w"], window_strides=(1, 1), padding=((1, 1), (1, 1)),
        dimension_numbers=("NHWC", "HWIO", "NHWC")) + p["b"]
    y = (y - p["run_mean"]) / jnp.sqrt(p["run_var"] + eps) * p["gamma"] + p["beta"]
    return jnp.where(y > 0, y, neg_slope * y)


def _ref_forward(x_nchw, params):
    x = jnp.transpose(x_nchw, (0, 2, 3, 1))
    for p in params:
        x = _ref_block(x, p)
    return jnp.transpose(x, (0, 3, 1, 2))


if __name__ == "__main__":
    key = jax.random.PRNGKey(0)
    kx, kp = jax.random.split(key)

    # StackedConvLayers(input_feature_channels=4, output_feature_channels=8,
    #                   num_convs=2), input NCHW = (2, 4, 16, 16)
    N, Cin, H, W = 2, 4, 16, 16
    Cout, num_convs = 8, 2

    x = jax.random.normal(kx, (N, Cin, H, W), jnp.float32)
    params = init_stacked_conv_params(kp, Cin, Cout, num_convs)
    ref = jax.block_until_ready(_ref_forward(x, params))

    # Exact eval-mode numerics (f32 matmul operands).
    prep_f32 = prepare_stacked_conv_params(params, W, compute_dtype=jnp.float32)
    out_f32 = jax.block_until_ready(stacked_conv_layers_forward(x, prep_f32))
    assert out_f32.shape == (N, Cout, H, W), out_f32.shape
    assert jnp.allclose(out_f32, ref, atol=2e-4, rtol=2e-4), (
        float(jnp.max(jnp.abs(out_f32 - ref))))

    # Performance configuration: bf16 matmul operands, f32 accumulation/epilogue.
    prep_bf16 = prepare_stacked_conv_params(params, W, compute_dtype=jnp.bfloat16)
    out_bf16 = jax.block_until_ready(stacked_conv_layers_forward(x, prep_bf16))
    assert out_bf16.shape == (N, Cout, H, W), out_bf16.shape
    assert jnp.allclose(out_bf16, ref, atol=5e-2, rtol=5e-2), (
        float(jnp.max(jnp.abs(out_bf16 - ref))))

    print("KERNEL_OK")
</pallas_src>

<mosaic_0001>
module attributes {stable_mosaic.version = 11 : i64} {
  func.func @_stacked_kernel(%arg0: i32, %arg1: memref<32x64xf32, #tpu.memory_space<vmem>>, %arg2: memref<2x128xf32, #tpu.memory_space<vmem>>, %arg3: memref<3x64x128xf32, #tpu.memory_space<vmem>>, %arg4: memref<3x128x128xf32, #tpu.memory_space<vmem>>, %arg5: memref<32x128xf32, #tpu.memory_space<vmem>>) attributes {dimension_semantics = [#tpu.dimension_semantics<parallel>], iteration_bounds = array<i64: 1>, scalar_prefetch = 0 : i64, scratch_operands = 0 : i64, tpu.core_type = #tpu.core_type<tc>, window_params = [{transform_indices = @transform_0, window_bounds = array<i64: 32, 64>}, {pipeline_mode = #tpu.pipeline_mode<synchronous>, transform_indices = @transform_1, window_bounds = array<i64: 2, 128>}, {pipeline_mode = #tpu.pipeline_mode<synchronous>, transform_indices = @transform_2, window_bounds = array<i64: 3, 64, 128>}, {pipeline_mode = #tpu.pipeline_mode<synchronous>, transform_indices = @transform_3, window_bounds = array<i64: 3, 128, 128>}, {transform_indices = @transform_4, window_bounds = array<i64: 32, 128>}]} {
    %0 = tpu.iota {dimensions = array<i32: 0>} : vector<32x1xi32>
    %c16_i32 = arith.constant 16 : i32
    %c0_i32 = arith.constant 0 : i32
    %1 = arith.cmpi eq, %c16_i32, %c0_i32 : i32
    %c1_i32 = arith.constant 1 : i32
    %2 = arith.select %1, %c1_i32, %c16_i32 : i32
    %3 = vector.broadcast %2 : i32 to vector<32x1xi32>
    %4 = arith.remsi %0, %3 : vector<32x1xi32>
    %c0_i32_0 = arith.constant 0 : i32
    %5 = vector.broadcast %c0_i32_0 : i32 to vector<32x1xi32>
    %6 = arith.cmpi ne, %4, %5 : vector<32x1xi32>
    %c0_i32_1 = arith.constant 0 : i32
    %7 = vector.broadcast %c0_i32_1 : i32 to vector<32x1xi32>
    %8 = arith.cmpi slt, %4, %7 : vector<32x1xi32>
    %c0_i32_2 = arith.constant 0 : i32
    %9 = arith.cmpi slt, %2, %c0_i32_2 : i32
    %10 = vector.broadcast %9 : i1 to vector<32x1xi1>
    %11 = vector.broadcast %10 : vector<32x1xi1> to vector<32x1xi1>
    %12 = arith.xori %8, %11 : vector<32x1xi1>
    %13 = arith.andi %12, %6 : vector<32x1xi1>
    %14 = vector.broadcast %2 : i32 to vector<32x1xi32>
    %15 = arith.addi %4, %14 : vector<32x1xi32>
    %16 = arith.select %13, %15, %4 : vector<32x1xi1>, vector<32x1xi32>
    %c0_i32_3 = arith.constant 0 : i32
    %17 = vector.broadcast %c0_i32_3 : i32 to vector<32x1xi32>
    %18 = arith.cmpi eq, %16, %17 : vector<32x1xi32>
    %c16_i32_4 = arith.constant 16 : i32
    %c0_i32_5 = arith.constant 0 : i32
    %19 = arith.cmpi eq, %c16_i32_4, %c0_i32_5 : i32
    %c1_i32_6 = arith.constant 1 : i32
    %20 = arith.select %19, %c1_i32_6, %c16_i32_4 : i32
    %21 = vector.broadcast %20 : i32 to vector<32x1xi32>
    %22 = arith.remsi %0, %21 : vector<32x1xi32>
    %c0_i32_7 = arith.constant 0 : i32
    %23 = vector.broadcast %c0_i32_7 : i32 to vector<32x1xi32>
    %24 = arith.cmpi ne, %22, %23 : vector<32x1xi32>
    %c0_i32_8 = arith.constant 0 : i32
    %25 = vector.broadcast %c0_i32_8 : i32 to vector<32x1xi32>
    %26 = arith.cmpi slt, %22, %25 : vector<32x1xi32>
    %c0_i32_9 = arith.constant 0 : i32
    %27 = arith.cmpi slt, %20, %c0_i32_9 : i32
    %28 = vector.broadcast %27 : i1 to vector<32x1xi1>
    %29 = vector.broadcast %28 : vector<32x1xi1> to vector<32x1xi1>
    %30 = arith.xori %26, %29 : vector<32x1xi1>
    %31 = arith.andi %30, %24 : vector<32x1xi1>
    %32 = vector.broadcast %20 : i32 to vector<32x1xi32>
    %33 = arith.addi %22, %32 : vector<32x1xi32>
    %34 = arith.select %31, %33, %22 : vector<32x1xi1>, vector<32x1xi32>
    %c15_i32 = arith.constant 15 : i32
    %35 = vector.broadcast %c15_i32 : i32 to vector<32x1xi32>
    %36 = arith.cmpi eq, %34, %35 : vector<32x1xi32>
    %c0 = arith.constant 0 : index
    %c0_10 = arith.constant 0 : index
    %37 = vector.load %arg1[%c0, %c0_10] : memref<32x64xf32, #tpu.memory_space<vmem>>, vector<32x64xf32>
    %c1 = arith.constant 1 : index
    %c0_11 = arith.constant 0 : index
    %c0_12 = arith.constant 0 : index
    %38 = vector.load %arg3[%c1, %c0_11, %c0_12] : memref<3x64x128xf32, #tpu.memory_space<vmem>>, vector<1x64x128xf32>
    %39 = vector.shape_cast %38 : vector<1x64x128xf32> to vector<64x128xf32>
    %cst = arith.constant dense<0.000000e+00> : vector<32x128xf32>
    %40 = tpu.matmul %37, %39, %cst {dimension_numbers = #tpu.dot_dimension_numbers<[1], [0], [0], [1], [0, 0, 1, 1], [], []>} : vector<32x64xf32>, vector<64x128xf32>, vector<32x128xf32> -> vector<32x128xf32>
    %c0_13 = arith.constant 0 : index
    %c0_14 = arith.constant 0 : index
    %c0_15 = arith.constant 0 : index
    %41 = vector.load %arg3[%c0_13, %c0_14, %c0_15] : memref<3x64x128xf32, #tpu.memory_space<vmem>>, vector<1x64x128xf32>
    %42 = vector.shape_cast %41 : vector<1x64x128xf32> to vector<64x128xf32>
    %cst_16 = arith.constant dense<0.000000e+00> : vector<32x128xf32>
    %43 = tpu.matmul %37, %42, %cst_16 {dimension_numbers = #tpu.dot_dimension_numbers<[1], [0], [0], [1], [0, 0, 1, 1], [], []>} : vector<32x64xf32>, vector<64x128xf32>, vector<32x128xf32> -> vector<32x128xf32>
    %c2 = arith.constant 2 : index
    %c0_17 = arith.constant 0 : index
    %c0_18 = arith.constant 0 : index
    %44 = vector.load %arg3[%c2, %c0_17, %c0_18] : memref<3x64x128xf32, #tpu.memory_space<vmem>>, vector<1x64x128xf32>
    %45 = vector.shape_cast %44 : vector<1x64x128xf32> to vector<64x128xf32>
    %cst_19 = arith.constant dense<0.000000e+00> : vector<32x128xf32>
    %46 = tpu.matmul %37, %45, %cst_19 {dimension_numbers = #tpu.dot_dimension_numbers<[1], [0], [0], [1], [0, 0, 1, 1], [], []>} : vector<32x64xf32>, vector<64x128xf32>, vector<32x128xf32> -> vector<32x128xf32>
    %c1_i32_20 = arith.constant 1 : i32
    %47 = tpu.dynamic_rotate %43 by %c1_i32_20 dim 0 : vector<32x128xf32>, i32 -> vector<32x128xf32>
    %c31_i32 = arith.constant 31 : i32
    %48 = tpu.dynamic_rotate %46 by %c31_i32 dim 0 : vector<32x128xf32>, i32 -> vector<32x128xf32>
    %cst_21 = arith.constant 0.000000e+00 : f32
    %49 = vector.shape_cast %18 : vector<32x1xi1> to vector<32x1xi1>
    %50 = vector.broadcast %49 : vector<32x1xi1> to vector<32x128xi1>
    %51 = vector.broadcast %cst_21 : f32 to vector<32x128xf32>
    %52 = arith.select %50, %51, %47 : vector<32x128xi1>, vector<32x128xf32>
    %53 = arith.addf %40, %52 : vector<32x128xf32>
    %cst_22 = arith.constant 0.000000e+00 : f32
    %54 = vector.shape_cast %36 : vector<32x1xi1> to vector<32x1xi1>
    %55 = vector.broadcast %54 : vector<32x1xi1> to vector<32x128xi1>
    %56 = vector.broadcast %cst_22 : f32 to vector<32x128xf32>
    %57 = arith.select %55, %56, %48 : vector<32x128xi1>, vector<32x128xf32>
    %58 = arith.addf %53, %57 : vector<32x128xf32>
    %c0_23 = arith.constant 0 : index
    %c0_24 = arith.constant 0 : index
    %59 = vector.load %arg2[%c0_23, %c0_24] : memref<2x128xf32, #tpu.memory_space<vmem>>, vector<1x128xf32>
    %60 = vector.broadcast %59 : vector<1x128xf32> to vector<32x128xf32>
    %61 = arith.addf %58, %60 : vector<32x128xf32>
    %cst_25 = arith.constant 0.00999999977 : f32
    %62 = vector.broadcast %cst_25 : f32 to vector<32x128xf32>
    %63 = arith.mulf %62, %61 : vector<32x128xf32>
    %64 = arith.maximumf %61, %63 : vector<32x128xf32>
    %c1_26 = arith.constant 1 : index
    %c0_27 = arith.constant 0 : index
    %c0_28 = arith.constant 0 : index
    %65 = vector.load %arg4[%c1_26, %c0_27, %c0_28] : memref<3x128x128xf32, #tpu.memory_space<vmem>>, vector<1x128x128xf32>
    %66 = vector.shape_cast %65 : vector<1x128x128xf32> to vector<128x128xf32>
    %cst_29 = arith.constant dense<0.000000e+00> : vector<32x128xf32>
    %67 = tpu.matmul %64, %66, %cst_29 {dimension_numbers = #tpu.dot_dimension_numbers<[1], [0], [0], [1], [0, 0, 1, 1], [], []>} : vector<32x128xf32>, vector<128x128xf32>, vector<32x128xf32> -> vector<32x128xf32>
    %c0_30 = arith.constant 0 : index
    %c0_31 = arith.constant 0 : index
    %c0_32 = arith.constant 0 : index
    %68 = vector.load %arg4[%c0_30, %c0_31, %c0_32] : memref<3x128x128xf32, #tpu.memory_space<vmem>>, vector<1x128x128xf32>
    %69 = vector.shape_cast %68 : vector<1x128x128xf32> to vector<128x128xf32>
    %cst_33 = arith.constant dense<0.000000e+00> : vector<32x128xf32>
    %70 = tpu.matmul %64, %69, %cst_33 {dimension_numbers = #tpu.dot_dimension_numbers<[1], [0], [0], [1], [0, 0, 1, 1], [], []>} : vector<32x128xf32>, vector<128x128xf32>, vector<32x128xf32> -> vector<32x128xf32>
    %c2_34 = arith.constant 2 : index
    %c0_35 = arith.constant 0 : index
    %c0_36 = arith.constant 0 : index
    %71 = vector.load %arg4[%c2_34, %c0_35, %c0_36] : memref<3x128x128xf32, #tpu.memory_space<vmem>>, vector<1x128x128xf32>
    %72 = vector.shape_cast %71 : vector<1x128x128xf32> to vector<128x128xf32>
    %cst_37 = arith.constant dense<0.000000e+00> : vector<32x128xf32>
    %73 = tpu.matmul %64, %72, %cst_37 {dimension_numbers = #tpu.dot_dimension_numbers<[1], [0], [0], [1], [0, 0, 1, 1], [], []>} : vector<32x128xf32>, vector<128x128xf32>, vector<32x128xf32> -> vector<32x128xf32>
    %c1_i32_38 = arith.constant 1 : i32
    %74 = tpu.dynamic_rotate %70 by %c1_i32_38 dim 0 : vector<32x128xf32>, i32 -> vector<32x128xf32>
    %c31_i32_39 = arith.constant 31 : i32
    %75 = tpu.dynamic_rotate %73 by %c31_i32_39 dim 0 : vector<32x128xf32>, i32 -> vector<32x128xf32>
    %cst_40 = arith.constant 0.000000e+00 : f32
    %76 = vector.shape_cast %18 : vector<32x1xi1> to vector<32x1xi1>
    %77 = vector.broadcast %76 : vector<32x1xi1> to vector<32x128xi1>
    %78 = vector.broadcast %cst_40 : f32 to vector<32x128xf32>
    %79 = arith.select %77, %78, %74 : vector<32x128xi1>, vector<32x128xf32>
    %80 = arith.addf %67, %79 : vector<32x128xf32>
    %cst_41 = arith.constant 0.000000e+00 : f32
    %81 = vector.shape_cast %36 : vector<32x1xi1> to vector<32x1xi1>
    %82 = vector.broadcast %81 : vector<32x1xi1> to vector<32x128xi1>
    %83 = vector.broadcast %cst_41 : f32 to vector<32x128xf32>
    %84 = arith.select %82, %83, %75 : vector<32x128xi1>, vector<32x128xf32>
    %85 = arith.addf %80, %84 : vector<32x128xf32>
    %c1_42 = arith.constant 1 : index
    %c0_43 = arith.constant 0 : index
    %86 = vector.load %arg2[%c1_42, %c0_43] : memref<2x128xf32, #tpu.memory_space<vmem>>, vector<1x128xf32>
    %87 = vector.broadcast %86 : vector<1x128xf32> to vector<32x128xf32>
    %88 = arith.addf %85, %87 : vector<32x128xf32>
    %cst_44 = arith.constant 0.00999999977 : f32
    %89 = vector.broadcast %cst_44 : f32 to vector<32x128xf32>
    %90 = arith.mulf %89, %88 : vector<32x128xf32>
    %91 = arith.maximumf %88, %90 : vector<32x128xf32>
    %c0_45 = arith.constant 0 : index
    %c0_46 = arith.constant 0 : index
    %92 = vector.load %arg5[%c0_45, %c0_46] : memref<32x128xf32, #tpu.memory_space<vmem>>, vector<32x128xf32>
    tpu.vector_store %arg5[%c0_45, %c0_46], %91 {strides = array<i32>} : memref<32x128xf32, #tpu.memory_space<vmem>>, vector<32x128xf32>,
    return
  }
  func.func @transform_0(%arg0: i32) -> (i32, i32) {
    %c0_i32 = arith.constant 0 : i32
    %c0_i32_0 = arith.constant 0 : i32
    return %arg0, %c0_i32 : i32, i32
  }
  func.func @transform_1(%arg0: i32) -> (i32, i32) {
    %c0_i32 = arith.constant 0 : i32
    %c0_i32_0 = arith.constant 0 : i32
    %c0_i32_1 = arith.constant 0 : i32
    return %c0_i32, %c0_i32_0 : i32, i32
  }
  func.func @transform_2(%arg0: i32) -> (i32, i32, i32) {
    %c0_i32 = arith.constant 0 : i32
    %c0_i32_0 = arith.constant 0 : i32
    %c0_i32_1 = arith.constant 0 : i32
    %c0_i32_2 = arith.constant 0 : i32
    return %c0_i32, %c0_i32_0, %c0_i32_1 : i32, i32, i32
  }
  func.func @transform_3(%arg0: i32) -> (i32, i32, i32) {
    %c0_i32 = arith.constant 0 : i32
    %c0_i32_0 = arith.constant 0 : i32
    %c0_i32_1 = arith.constant 0 : i32
    %c0_i32_2 = arith.constant 0 : i32
    return %c0_i32, %c0_i32_0, %c0_i32_1 : i32, i32, i32
  }
  func.func @transform_4(%arg0: i32) -> (i32, i32) {
    %c0_i32 = arith.constant 0 : i32
    %c0_i32_0 = arith.constant 0 : i32
    return %arg0, %c0_i32 : i32, i32
  }
}

</mosaic_0001>

<llo_original>
// kernel: tpu_custom_call.1
$region0: #{tpu_custom_call.1}
  #allocation0 [shape = 'u32[]', space=smem, size = 0x4, offset = 0x4, fixed_abs, tag = 'smem constant byte address 0x4 - core index']
  #allocation1 [shape = 'u32[144,128]{1,0:T(1,128)}', space=vmem, size = 0x12000, scoped, tag = 'internal scratch']
  %s0 = inlined_call_operand.hbm [shape: f32[32,64], index: 0, kind: input, shape index: {}]
  %s1 = inlined_call_operand.hbm [shape: f32[2,128], index: 1, kind: input, shape index: {}]
  %s2 = inlined_call_operand.hbm [shape: f32[3,64,128], index: 2, kind: input, shape index: {}]
  %s3 = inlined_call_operand.hbm [shape: f32[3,128,128], index: 3, kind: input, shape index: {}]
  %s4 = inlined_call_operand.hbm [shape: f32[32,128], index: 4, kind: output, shape index: {}]
  %s5 = sld [smem:[#allocation0]]
  $region42: #{tpu_custom_call.1} parent=0
    _
  %s7 = ssub.s32 1, %s5
  %s8 = scalar_select 0, %s7, %s5
  $region1: #{tpu_custom_call.1} parent=0
    #allocation2 [shape = 'u8[16384]{0}', space=vmem, size = 0x4000, scoped, tag = 'input window, operand 0, single buffered']
    #allocation3 [shape = 's32[1]{0}', space=sflag, size = 0x4, scoped, tag = 'scoped memory for tpu_custom_call.1']
    #allocation4 [shape = 's32[1]{0}', space=sflag, size = 0x4, scoped, tag = 'scoped memory for tpu_custom_call.1']
    #allocation5 [shape = 'u8[1024]{0}', space=vmem, size = 0x400, scoped, tag = 'input window, operand 1, single buffered']
    #allocation6 [shape = 's32[1]{0}', space=sflag, size = 0x4, scoped, tag = 'scoped memory for tpu_custom_call.1']
    #allocation7 [shape = 'u8[98304]{0}', space=vmem, size = 0x18000, scoped, tag = 'input window, operand 2, single buffered']
    #allocation8 [shape = 'u8[196608]{0}', space=vmem, size = 0x30000, scoped, tag = 'input window, operand 3, single buffered']
    #allocation9 [shape = 's32[1]{0}', space=sflag, size = 0x4, scoped, tag = 'scoped memory for tpu_custom_call.1']
    #allocation10 [shape = 'u8[16384]{0}', space=vmem, size = 0x4000, scoped, tag = 'output window, operand 0, single buffered']
    %9 = vsyncpa [#allocation3], 0
    %10 = vsyncpa [#allocation6], 0
    %11 = vsyncpa [#allocation9], 0
    %12 = vsyncpa [#allocation4], 0
    // Predicated region
    $region2: #{tpu_custom_call.1} parent=1 // pred_check
      _
    $region3: #{tpu_custom_call.1} parent=1 // pred_check_branch
      %14 = sbr.rel (0) target = $region5
    $region4: #{tpu_custom_call.1} parent=1 // pred_region
      %s16 = ssub.s32 512, 512
      %17 = vsyncadd [#allocation3], %s16
      %s18 = sshll.u32 [#allocation2], 4
      %s19 = int_to_ptr.vmem [resolvable:$true] %s18
      %24 = dma.hbm_to_vmem [thread:$0]  %s0, 512, %s19, [#allocation3], 128, 128, 8
    $region5: #{tpu_custom_call.1} parent=1 // pred_fallthru
      _
    // Predicated region
    $region6: #{tpu_custom_call.1} parent=1 // pred_check
      _
    $region7: #{tpu_custom_call.1} parent=1 // pred_check_branch
      %26 = sbr.rel (0) target = $region9
    $region8: #{tpu_custom_call.1} parent=1 // pred_region
      %s28 = ssub.s32 32, 32
      %29 = vsyncadd [#allocation6], %s28
      %s31 = sshll.u32 [#allocation5], 4
      %s32 = int_to_ptr.vmem [resolvable:$true] %s31
      %34 = dma.hbm_to_vmem [thread:$0]  %s1, 32, %s32, [#allocation6]
    $region9: #{tpu_custom_call.1} parent=1 // pred_fallthru
      _
    // Predicated region
    $region10: #{tpu_custom_call.1} parent=1 // pred_check
      _
    $region11: #{tpu_custom_call.1} parent=1 // pred_check_branch
      %36 = sbr.rel (0) target = $region13
    $region12: #{tpu_custom_call.1} parent=1 // pred_region
      %s38 = ssub.s32 3072, 3072
      %39 = vsyncadd [#allocation6], %s38
      %s40 = sshll.u32 [#allocation7], 4
      %s41 = int_to_ptr.vmem [resolvable:$true] %s40
      %46 = dma.hbm_to_vmem [thread:$0]  %s2, 3072, %s41, [#allocation6], 128, 128, 8
    $region13: #{tpu_custom_call.1} parent=1 // pred_fallthru
      _
    // Predicated region
    $region14: #{tpu_custom_call.1} parent=1 // pred_check
      _
    $region15: #{tpu_custom_call.1} parent=1 // pred_check_branch
      %48 = sbr.rel (0) target = $region17
    $region16: #{tpu_custom_call.1} parent=1 // pred_region
      %s50 = ssub.s32 6144, 6144
      %51 = vsyncadd [#allocation9], %s50
      %s52 = sshll.u32 [#allocation8], 4
      %s53 = int_to_ptr.vmem [resolvable:$true] %s52
      %58 = dma.hbm_to_vmem [thread:$0]  %s3, 6144, %s53, [#allocation9], 128, 128, 8
    $region17: #{tpu_custom_call.1} parent=1 // pred_fallthru
      _
    // Predicated region
    $region18: #{tpu_custom_call.1} parent=1 // pred_check
      _
    $region19: #{tpu_custom_call.1} parent=1 // pred_check_branch
      %60 = sbr.rel (0) target = $region21
    $region20: #{tpu_custom_call.1} parent=1 // pred_region
      %61 = dma.done [#allocation3], 512
    $region21: #{tpu_custom_call.1} parent=1 // pred_fallthru
      _
    // Predicated region
    $region22: #{tpu_custom_call.1} parent=1 // pred_check
      _
    $region23: #{tpu_custom_call.1} parent=1 // pred_check_branch
      %63 = sbr.rel (0) target = $region25
    $region24: #{tpu_custom_call.1} parent=1 // pred_region
      %64 = dma.done [#allocation6], 32
    $region25: #{tpu_custom_call.1} parent=1 // pred_fallthru
      _
    // Predicated region
    $region26: #{tpu_custom_call.1} parent=1 // pred_check
      _
    $region27: #{tpu_custom_call.1} parent=1 // pred_check_branch
      %66 = sbr.rel (0) target = $region29
    $region28: #{tpu_custom_call.1} parent=1 // pred_region
      %67 = dma.done [#allocation6], 3072
    $region29: #{tpu_custom_call.1} parent=1 // pred_fallthru
      _
    // Predicated region
    $region30: #{tpu_custom_call.1} parent=1 // pred_check
      _
    $region31: #{tpu_custom_call.1} parent=1 // pred_check_branch
      %69 = sbr.rel (0) target = $region33
    $region32: #{tpu_custom_call.1} parent=1 // pred_region
      %70 = dma.done [#allocation9], 6144
    $region33: #{tpu_custom_call.1} parent=1 // pred_fallthru
      _
    %v71 = vlaneseq
    %v72 = vshrl.u32 %v71, 7
    %v73 = vadd.s32 %v72, 8
    %v74 = vadd.s32 %v72, 16
    %v75 = vadd.s32 %v72, 24
    %vm76 = vcmp.lt.s32.totalorder %v72, 0
    %v77 = vsub.s32 0, %v72
    %v78 = vsel %vm76, %v77, %v72
    %v79 = vshrl.u32 %v78, 4
    %v80 = vand.u32 %v78, 15
    %v81 = vsub.s32 0, %v80
    %v82 = vsel %vm76, %v81, %v80
    %vm83 = vcmp.lt.s32.totalorder %v73, 0
    %v84 = vsub.s32 0, %v73
    %v85 = vsel %vm83, %v84, %v73
    %v86 = vshrl.u32 %v85, 4
    %v87 = vand.u32 %v85, 15
    %v88 = vsub.s32 0, %v87
    %v89 = vsel %vm83, %v88, %v87
    %vm90 = vcmp.lt.s32.totalorder %v74, 0
    %v91 = vsub.s32 0, %v74
    %v92 = vsel %vm90, %v91, %v74
    %v93 = vshrl.u32 %v92, 4
    %v94 = vand.u32 %v92, 15
    %v95 = vsub.s32 0, %v94
    %v96 = vsel %vm90, %v95, %v94
    %vm97 = vcmp.lt.s32.totalorder %v75, 0
    %v98 = vsub.s32 0, %v75
    %v99 = vsel %vm97, %v98, %v75
    %v100 = vshrl.u32 %v99, 4
    %v101 = vand.u32 %v99, 15
    %v102 = vsub.s32 0, %v101
    %v103 = vsel %vm97, %v102, %v101
    %vm104 = vcmp.ne.s32.totalorder %v82, 0
    %vm105 = vcmp.ne.s32.totalorder %v89, 0
    %vm106 = vcmp.ne.s32.totalorder %v96, 0
    %vm107 = vcmp.ne.s32.totalorder %v103, 0
    %vm108 = vcmp.lt.s32.totalorder %v82, 0
    %vm109 = vcmp.lt.s32.totalorder %v89, 0
    %vm110 = vcmp.lt.s32.totalorder %v96, 0
    %vm111 = vcmp.lt.s32.totalorder %v103, 0
    %vm112 = vmand %vm108, %vm104
    %vm113 = vmand %vm109, %vm105
    %vm114 = vmand %vm110, %vm106
    %vm115 = vmand %vm111, %vm107
    %v116 = vadd.s32 %v82, 16
    %v117 = vadd.s32 %v89, 16
    %v118 = vadd.s32 %v96, 16
    %v119 = vadd.s32 %v103, 16
    %v120 = vsel %vm112, %v116, %v82
    %v121 = vsel %vm113, %v117, %v89
    %v122 = vsel %vm114, %v118, %v96
    %v123 = vsel %vm115, %v119, %v103
    %vm124 = vcmp.eq.s32.totalorder %v120, 0
    %vm125 = vcmp.eq.s32.totalorder %v121, 0
    %vm126 = vcmp.eq.s32.totalorder %v122, 0
    %vm127 = vcmp.eq.s32.totalorder %v123, 0
    %vm128 = vcmp.eq.s32.totalorder %v120, 15
    %vm129 = vcmp.eq.s32.totalorder %v121, 15
    %vm130 = vcmp.eq.s32.totalorder %v122, 15
    %vm131 = vcmp.eq.s32.totalorder %v123, 15
    %v132 = vld [vmem:[#allocation2] sm:$0xff]
    %v133 = vld [vmem:[#allocation2 + $0x8] sm:$0xff]
    %v134 = vld [vmem:[#allocation2 + $0x10] sm:$0xff]
    %v135 = vld [vmem:[#allocation2 + $0x18] sm:$0xff]
    %s136 = scalar_lea.vmem [#allocation7], 64
    %v137 = vld [vmem:[%s136] sm:$0xff]
    %v138 = vld [vmem:[%s136 + $0x8] sm:$0xff]
    %v139 = vld [vmem:[%s136 + $0x10] sm:$0xff]
    %v140 = vld [vmem:[%s136 + $0x18] sm:$0xff]
    %v141 = vld [vmem:[%s136 + $0x20] sm:$0xff]
    %v142 = vld [vmem:[%s136 + $0x28] sm:$0xff]
    %v143 = vld [vmem:[%s136 + $0x30] sm:$0xff]
    %v144 = vld [vmem:[%s136 + $0x38] sm:$0xff]
    %v145 = vld [vmem:[#allocation7] sm:$0xff]
    %v146 = vld [vmem:[#allocation7 + $0x8] sm:$0xff]
    %v147 = vld [vmem:[#allocation7 + $0x10] sm:$0xff]
    %v148 = vld [vmem:[#allocation7 + $0x18] sm:$0xff]
    %v149 = vld [vmem:[#allocation7 + $0x20] sm:$0xff]
    %v150 = vld [vmem:[#allocation7 + $0x28] sm:$0xff]
    %v151 = vld [vmem:[#allocation7 + $0x30] sm:$0xff]
    %v152 = vld [vmem:[#allocation7 + $0x38] sm:$0xff]
    %vm153 = vcmask 523264
    %v155 = vsel %vm153, %v132, 0
    %v158 = vsel %vm153, %v133, 0
    %v161 = vsel %vm153, %v134, 0
    %v164 = vsel %vm153, %v135, 0
    %166 = vmatprep.subr.mxu0 0.0
    %167 = vmatpush1.msra.mxu0 0.0
    %168 = vmatprep.subr.mxu0 0.0
    %169 = vmatpush1.msra.mxu0 0.0
    %170 = vmatprep.subr.mxu0 0.0
    %171 = vmatpush1.msra.mxu0 0.0
    %172 = vmatprep.subr.mxu0 0.0
    %173 = vmatpush1.msra.mxu0 0.0
    %174 = vmatprep.subr.mxu0 0.0
    %175 = vmatpush1.msra.mxu0 0.0
    %176 = vmatprep.subr.mxu0 0.0
    %177 = vmatpush1.msra.mxu0 0.0
    %178 = vmatprep.subr.mxu0 0.0
    %179 = vmatpush1.msra.mxu0 0.0
    %180 = vmatprep.subr.mxu0 0.0
    %181 = vmatpush1.msra.mxu0 0.0
    %182 = vmatprep.subr.mxu0 0.0
    %183 = vmatpush1.msra.mxu0 %v152
    %184 = vmatprep.subr.mxu0 0.0
    %185 = vmatpush1.msra.mxu0 %v151
    %186 = vmatprep.subr.mxu0 0.0
    %187 = vmatpush1.msra.mxu0 %v150
    %188 = vmatprep.subr.mxu0 0.0
    %189 = vmatpush1.msra.mxu0 %v149
    %190 = vmatprep.subr.mxu0 0.0
    %191 = vmatpush1.msra.mxu0 %v148
    %192 = vmatprep.subr.mxu0 0.0
    %193 = vmatpush1.msra.mxu0 %v147
    %194 = vmatprep.subr.mxu0 0.0
    %195 = vmatpush1.msra.mxu0 %v146
    %196 = vmatprep.subr.mxu0 0.0
    %197 = vmatpush1.msra.mxu0 %v145
    %198 = vmatprep.subr.mxu0 0.0
    %199 = vmatpush2.msra.mxu0 0.0
    %200 = vmatprep.subr.mxu0 0.0
    %201 = vmatpush2.msra.mxu0 0.0
    %202 = vmatprep.subr.mxu0 0.0
    %203 = vmatpush2.msra.mxu0 0.0
    %204 = vmatprep.subr.mxu0 0.0
    %205 = vmatpush2.msra.mxu0 0.0
    %206 = vmatprep.subr.mxu0 0.0
    %207 = vmatpush2.msra.mxu0 0.0
    %208 = vmatprep.subr.mxu0 0.0
    %209 = vmatpush2.msra.mxu0 0.0
    %210 = vmatprep.subr.mxu0 0.0
    %211 = vmatpush2.msra.mxu0 0.0
    %212 = vmatprep.subr.mxu0 0.0
    %213 = vmatpush2.msra.mxu0 0.0
    %214 = vmatprep.subr.mxu0 0.0
    %215 = vmatpush2.msra.mxu0 0.0
    %216 = vmatprep.subr.mxu0 0.0
    %217 = vmatpush2.msra.mxu0 0.0
    %218 = vmatprep.subr.mxu0 0.0
    %219 = vmatpush2.msra.mxu0 0.0
    %220 = vmatprep.subr.mxu0 0.0
    %221 = vmatpush2.msra.mxu0 0.0
    %222 = vmatprep.subr.mxu0 0.0
    %223 = vmatpush2.msra.mxu0 0.0
    %224 = vmatprep.subr.mxu0 0.0
    %225 = vmatpush2.msra.mxu0 0.0
    %226 = vmatprep.subr.mxu0 0.0
    %227 = vmatpush2.msra.mxu0 0.0
    %228 = vmatprep.subr.mxu0 0.0
    %229 = vmatpush2.msra.mxu0 0.0
    %230 = vmatprep.mubr.f32.mxu0 0.0
    %231 = vmatmul.mubr.f32.gmra.mxu0 %v155
    %v232 = vpop.f32.mrf.mxu0
    %v233 = vadd.f32 0.0, %v232
    %v234 = vpop.f32.mrf.mxu0
    %235 = vmatprep.mubr.f32.mxu0 0.0
    %236 = vmatmul.mubr.f32.gmra.mxu0 %v158
    %v237 = vpop.f32.mrf.mxu0
    %v238 = vadd.f32 0.0, %v237
    %v239 = vpop.f32.mrf.mxu0
    %240 = vmatprep.mubr.f32.mxu0 0.0
    %241 = vmatmul.mubr.f32.gmra.mxu0 %v161
    %v242 = vpop.f32.mrf.mxu0
    %v243 = vadd.f32 0.0, %v242
    %v244 = vpop.f32.mrf.mxu0
    %245 = vmatprep.mubr.f32.mxu0 0.0
    %246 = vmatmul.mubr.f32.gmra.mxu0 %v164
    %v247 = vpop.f32.mrf.mxu0
    %v248 = vadd.f32 0.0, %v247
    %v249 = vpop.f32.mrf.mxu0
    %250 = vdwg.mxu0
    %s251 = scalar_lea.vmem [#allocation7], 128
    %v252 = vld [vmem:[%s251] sm:$0xff]
    %v253 = vld [vmem:[%s251 + $0x8] sm:$0xff]
    %v254 = vld [vmem:[%s251 + $0x10] sm:$0xff]
    %v255 = vld [vmem:[%s251 + $0x18] sm:$0xff]
    %v256 = vld [vmem:[%s251 + $0x20] sm:$0xff]
    %v257 = vld [vmem:[%s251 + $0x28] sm:$0xff]
    %v258 = vld [vmem:[%s251 + $0x30] sm:$0xff]
    %v259 = vld [vmem:[%s251 + $0x38] sm:$0xff]
    %260 = vmatprep.subr.mxu0 0.0
    %261 = vmatpush1.msra.mxu0 0.0
    %262 = vmatprep.subr.mxu0 0.0
    %263 = vmatpush1.msra.mxu0 0.0
    %264 = vmatprep.subr.mxu0 0.0
    %265 = vmatpush1.msra.mxu0 0.0
    %266 = vmatprep.subr.mxu0 0.0
    %267 = vmatpush1.msra.mxu0 0.0
    %268 = vmatprep.subr.mxu0 0.0
    %269 = vmatpush1.msra.mxu0 0.0
    %270 = vmatprep.subr.mxu0 0.0
    %271 = vmatpush1.msra.mxu0 0.0
    %272 = vmatprep.subr.mxu0 0.0
    %273 = vmatpush1.msra.mxu0 0.0
    %274 = vmatprep.subr.mxu0 0.0
    %275 = vmatpush1.msra.mxu0 0.0
    %276 = vmatprep.subr.mxu0 0.0
    %277 = vmatpush1.msra.mxu0 %v259
    %278 = vmatprep.subr.mxu0 0.0
    %279 = vmatpush1.msra.mxu0 %v258
    %280 = vmatprep.subr.mxu0 0.0
    %281 = vmatpush1.msra.mxu0 %v257
    %282 = vmatprep.subr.mxu0 0.0
    %283 = vmatpush1.msra.mxu0 %v256
    %284 = vmatprep.subr.mxu0 0.0
    %285 = vmatpush1.msra.mxu0 %v255
    %286 = vmatprep.subr.mxu0 0.0
    %287 = vmatpush1.msra.mxu0 %v254
    %288 = vmatprep.subr.mxu0 0.0
    %289 = vmatpush1.msra.mxu0 %v253
    %290 = vmatprep.subr.mxu0 0.0
    %291 = vmatpush1.msra.mxu0 %v252
    %292 = vmatprep.subr.mxu0 0.0
    %293 = vmatpush2.msra.mxu0 0.0
    %294 = vmatprep.subr.mxu0 0.0
    %295 = vmatpush2.msra.mxu0 0.0
    %296 = vmatprep.subr.mxu0 0.0
    %297 = vmatpush2.msra.mxu0 0.0
    %298 = vmatprep.subr.mxu0 0.0
    %299 = vmatpush2.msra.mxu0 0.0
    %300 = vmatprep.subr.mxu0 0.0
    %301 = vmatpush2.msra.mxu0 0.0
    %302 = vmatprep.subr.mxu0 0.0
    %303 = vmatpush2.msra.mxu0 0.0
    %304 = vmatprep.subr.mxu0 0.0
    %305 = vmatpush2.msra.mxu0 0.0
    %306 = vmatprep.subr.mxu0 0.0
    %307 = vmatpush2.msra.mxu0 0.0
    %308 = vmatprep.subr.mxu0 0.0
    %309 = vmatpush2.msra.mxu0 0.0
    %310 = vmatprep.subr.mxu0 0.0
    %311 = vmatpush2.msra.mxu0 0.0
    %312 = vmatprep.subr.mxu0 0.0
    %313 = vmatpush2.msra.mxu0 0.0
    %314 = vmatprep.subr.mxu0 0.0
    %315 = vmatpush2.msra.mxu0 0.0
    %316 = vmatprep.subr.mxu0 0.0
    %317 = vmatpush2.msra.mxu0 0.0
    %318 = vmatprep.subr.mxu0 0.0
    %319 = vmatpush2.msra.mxu0 0.0
    %320 = vmatprep.subr.mxu0 0.0
    %321 = vmatpush2.msra.mxu0 0.0
    %322 = vmatprep.subr.mxu0 0.0
    %323 = vmatpush2.msra.mxu0 0.0
    %324 = vmatprep.mubr.f32.mxu0 0.0
    %325 = vmatmul.mubr.f32.gmra.mxu0 %v155
    %v326 = vpop.f32.mrf.mxu0
    %v327 = vadd.f32 0.0, %v326
    %v328 = vpop.f32.mrf.mxu0
    %329 = vmatprep.mubr.f32.mxu0 0.0
    %330 = vmatmul.mubr.f32.gmra.mxu0 %v158
    %v331 = vpop.f32.mrf.mxu0
    %v332 = vadd.f32 0.0, %v331
    %v333 = vpop.f32.mrf.mxu0
    %334 = vmatprep.mubr.f32.mxu0 0.0
    %335 = vmatmul.mubr.f32.gmra.mxu0 %v161
    %v336 = vpop.f32.mrf.mxu0
    %v337 = vadd.f32 0.0, %v336
    %v338 = vpop.f32.mrf.mxu0
    %339 = vmatprep.mubr.f32.mxu0 0.0
    %340 = vmatmul.mubr.f32.gmra.mxu0 %v164
    %v341 = vpop.f32.mrf.mxu0
    %v342 = vadd.f32 0.0, %v341
    %v343 = vpop.f32.mrf.mxu0
    %344 = vdwg.mxu0
    %v345 = vrot.slane %v233, 7
    %v346 = vrot.slane %v238, 7
    %v347 = vrot.slane %v243, 7
    %v348 = vrot.slane %v248, 7
    %vm349 = vcmp.lt.s32.totalorder %v72, 1
    %v350 = vsel %vm349, %v347, %v348
    %v351 = vsel %vm349, %v346, %v347
    %v352 = vsel %vm349, %v345, %v346
    %v353 = vsel %vm349, %v348, %v345
    %v354 = vrot.slane %v327, 1
    %v355 = vrot.slane %v332, 1
    %v356 = vrot.slane %v337, 1
    %v357 = vrot.slane %v342, 1
    %vm358 = vcmp.lt.s32.totalorder %v72, 7
    %v359 = vsel %vm358, %v356, %v357
    %v360 = vsel %vm358, %v355, %v356
    %v361 = vsel %vm358, %v354, %v355
    %v362 = vsel %vm358, %v357, %v354
    %v363 = vsel %vm124, 1, 0
    %v364 = vsel %vm125, 1, 0
    %v365 = vsel %vm126, 1, 0
    %v366 = vsel %vm127, 1, 0
    %vm367 = vcmp.eq.s32.totalorder %v363, 1
    %vm368 = vcmp.eq.s32.totalorder %v364, 1
    %vm369 = vcmp.eq.s32.totalorder %v365, 1
    %vm370 = vcmp.eq.s32.totalorder %v366, 1
    %v371 = vsel %vm367, 0.0, %v353
    %v372 = vsel %vm368, 0.0, %v352
    %v373 = vsel %vm369, 0.0, %v351
    %v374 = vsel %vm370, 0.0, %v350
    %375 = vmatprep.subr.mxu0 0.0
    %376 = vmatpush1.msra.mxu0 0.0
    %377 = vmatprep.subr.mxu0 0.0
    %378 = vmatpush1.msra.mxu0 0.0
    %379 = vmatprep.subr.mxu0 0.0
    %380 = vmatpush1.msra.mxu0 0.0
    %381 = vmatprep.subr.mxu0 0.0
    %382 = vmatpush1.msra.mxu0 0.0
    %383 = vmatprep.subr.mxu0 0.0
    %384 = vmatpush1.msra.mxu0 0.0
    %385 = vmatprep.subr.mxu0 0.0
    %386 = vmatpush1.msra.mxu0 0.0
    %387 = vmatprep.subr.mxu0 0.0
    %388 = vmatpush1.msra.mxu0 0.0
    %389 = vmatprep.subr.mxu0 0.0
    %390 = vmatpush1.msra.mxu0 0.0
    %391 = vmatprep.subr.mxu0 0.0
    %392 = vmatpush1.msra.mxu0 %v144
    %393 = vmatprep.subr.mxu0 0.0
    %394 = vmatpush1.msra.mxu0 %v143
    %395 = vmatprep.subr.mxu0 0.0
    %396 = vmatpush1.msra.mxu0 %v142
    %397 = vmatprep.subr.mxu0 0.0
    %398 = vmatpush1.msra.mxu0 %v141
    %399 = vmatprep.subr.mxu0 0.0
    %400 = vmatpush1.msra.mxu0 %v140
    %401 = vmatprep.subr.mxu0 0.0
    %402 = vmatpush1.msra.mxu0 %v139
    %403 = vmatprep.subr.mxu0 0.0
    %404 = vmatpush1.msra.mxu0 %v138
    %405 = vmatprep.subr.mxu0 0.0
    %406 = vmatpush1.msra.mxu0 %v137
    %407 = vmatprep.subr.mxu0 0.0
    %408 = vmatpush2.msra.mxu0 0.0
    %409 = vmatprep.subr.mxu0 0.0
    %410 = vmatpush2.msra.mxu0 0.0
    %411 = vmatprep.subr.mxu0 0.0
    %412 = vmatpush2.msra.mxu0 0.0
    %413 = vmatprep.subr.mxu0 0.0
    %414 = vmatpush2.msra.mxu0 0.0
    %415 = vmatprep.subr.mxu0 0.0
    %416 = vmatpush2.msra.mxu0 0.0
    %417 = vmatprep.subr.mxu0 0.0
    %418 = vmatpush2.msra.mxu0 0.0
    %419 = vmatprep.subr.mxu0 0.0
    %420 = vmatpush2.msra.mxu0 0.0
    %421 = vmatprep.subr.mxu0 0.0
    %422 = vmatpush2.msra.mxu0 0.0
    %423 = vmatprep.subr.mxu0 0.0
    %424 = vmatpush2.msra.mxu0 0.0
    %425 = vmatprep.subr.mxu0 0.0
    %426 = vmatpush2.msra.mxu0 0.0
    %427 = vmatprep.subr.mxu0 0.0
    %428 = vmatpush2.msra.mxu0 0.0
    %429 = vmatprep.subr.mxu0 0.0
    %430 = vmatpush2.msra.mxu0 0.0
    %431 = vmatprep.subr.mxu0 0.0
    %432 = vmatpush2.msra.mxu0 0.0
    %433 = vmatprep.subr.mxu0 0.0
    %434 = vmatpush2.msra.mxu0 0.0
    %435 = vmatprep.subr.mxu0 0.0
    %436 = vmatpush2.msra.mxu0 0.0
    %437 = vmatprep.subr.mxu0 0.0
    %438 = vmatpush2.msra.mxu0 0.0
    %439 = vmatprep.mubr.f32.mxu0 0.0
    %440 = vmatmul.mubr.f32.gmra.mxu0 %v155
    %v441 = vpop.f32.mrf.mxu0
    %v442 = vadd.f32 %v371, %v441
    %v443 = vpop.f32.mrf.mxu0
    %444 = vmatprep.mubr.f32.mxu0 0.0
    %445 = vmatmul.mubr.f32.gmra.mxu0 %v158
    %v446 = vpop.f32.mrf.mxu0
    %v447 = vadd.f32 %v372, %v446
    %v448 = vpop.f32.mrf.mxu0
    %449 = vmatprep.mubr.f32.mxu0 0.0
    %450 = vmatmul.mubr.f32.gmra.mxu0 %v161
    %v451 = vpop.f32.mrf.mxu0
    %v452 = vadd.f32 %v373, %v451
    %v453 = vpop.f32.mrf.mxu0
    %454 = vmatprep.mubr.f32.mxu0 0.0
    %455 = vmatmul.mubr.f32.gmra.mxu0 %v164
    %v456 = vpop.f32.mrf.mxu0
    %v457 = vadd.f32 %v374, %v456
    %v458 = vpop.f32.mrf.mxu0
    %459 = vdwg.mxu0
    %v460 = vsel %vm128, 1, 0
    %v461 = vsel %vm129, 1, 0
    %v462 = vsel %vm130, 1, 0
    %v463 = vsel %vm131, 1, 0
    %vm464 = vcmp.eq.s32.totalorder %v460, 1
    %vm465 = vcmp.eq.s32.totalorder %v461, 1
    %vm466 = vcmp.eq.s32.totalorder %v462, 1
    %vm467 = vcmp.eq.s32.totalorder %v463, 1
    %v468 = vsel %vm464, 0.0, %v361
    %v469 = vsel %vm465, 0.0, %v360
    %v470 = vsel %vm466, 0.0, %v359
    %v471 = vsel %vm467, 0.0, %v362
    %v472 = vadd.f32 %v442, %v468
    %v473 = vadd.f32 %v447, %v469
    %v474 = vadd.f32 %v452, %v470
    %v475 = vadd.f32 %v457, %v471
    %v476 = vld [vmem:[#allocation5] sm:$0x1]
    %v477 = vlaneseq
    %v478 = vshrl.u32 %v477, 7
    %v479 = vsub.s32 0, %v478
    %v480 = vrot.slane %v476, %v479
    %v481 = vadd.f32 %v472, %v480
    %v482 = vadd.f32 %v473, %v480
    %v483 = vadd.f32 %v474, %v480
    %v484 = vadd.f32 %v475, %v480
    %v485 = vmul.f32 %v481, 0.01
    %v486 = vmul.f32 %v482, 0.01
    %v487 = vmul.f32 %v483, 0.01
    %v488 = vmul.f32 %v484, 0.01
    %v489 = vmax.f32 %v481, %v485
    %v490 = vmax.f32 %v482, %v486
    %v491 = vmax.f32 %v483, %v487
    %v492 = vmax.f32 %v484, %v488
    %s493 = scalar_lea.vmem [#allocation8], 128
    %v494 = vld [vmem:[%s493] sm:$0xff]
    %v495 = vld [vmem:[%s493 + $0x8] sm:$0xff]
    %v496 = vld [vmem:[%s493 + $0x10] sm:$0xff]
    %v497 = vld [vmem:[%s493 + $0x18] sm:$0xff]
    %v498 = vld [vmem:[%s493 + $0x20] sm:$0xff]
    %v499 = vld [vmem:[%s493 + $0x28] sm:$0xff]
    %v500 = vld [vmem:[%s493 + $0x30] sm:$0xff]
    %v501 = vld [vmem:[%s493 + $0x38] sm:$0xff]
    %v502 = vld [vmem:[%s493 + $0x40] sm:$0xff]
    %v503 = vld [vmem:[%s493 + $0x48] sm:$0xff]
    %v504 = vld [vmem:[%s493 + $0x50] sm:$0xff]
    %v505 = vld [vmem:[%s493 + $0x58] sm:$0xff]
    %v506 = vld [vmem:[%s493 + $0x60] sm:$0xff]
    %v507 = vld [vmem:[%s493 + $0x68] sm:$0xff]
    %v508 = vld [vmem:[%s493 + $0x70] sm:$0xff]
    %v509 = vld [vmem:[%s493 + $0x78] sm:$0xff]
    %v510 = vld [vmem:[#allocation8] sm:$0xff]
    %v511 = vld [vmem:[#allocation8 + $0x8] sm:$0xff]
    %v512 = vld [vmem:[#allocation8 + $0x10] sm:$0xff]
    %v513 = vld [vmem:[#allocation8 + $0x18] sm:$0xff]
    %v514 = vld [vmem:[#allocation8 + $0x20] sm:$0xff]
    %v515 = vld [vmem:[#allocation8 + $0x28] sm:$0xff]
    %v516 = vld [vmem:[#allocation8 + $0x30] sm:$0xff]
    %v517 = vld [vmem:[#allocation8 + $0x38] sm:$0xff]
    %v518 = vld [vmem:[#allocation8 + $0x40] sm:$0xff]
    %v519 = vld [vmem:[#allocation8 + $0x48] sm:$0xff]
    %v520 = vld [vmem:[#allocation8 + $0x50] sm:$0xff]
    %v521 = vld [vmem:[#allocation8 + $0x58] sm:$0xff]
    %v522 = vld [vmem:[#allocation8 + $0x60] sm:$0xff]
    %v523 = vld [vmem:[#allocation8 + $0x68] sm:$0xff]
    %v524 = vld [vmem:[#allocation8 + $0x70] sm:$0xff]
    %v525 = vld [vmem:[#allocation8 + $0x78] sm:$0xff]
    %526 = vmatprep.subr.mxu0 0.0
    %527 = vmatpush1.msra.mxu0 %v525
    %528 = vmatprep.subr.mxu0 0.0
    %529 = vmatpush1.msra.mxu0 %v524
    %530 = vmatprep.subr.mxu0 0.0
    %531 = vmatpush1.msra.mxu0 %v523
    %532 = vmatprep.subr.mxu0 0.0
    %533 = vmatpush1.msra.mxu0 %v522
    %534 = vmatprep.subr.mxu0 0.0
    %535 = vmatpush1.msra.mxu0 %v521
    %536 = vmatprep.subr.mxu0 0.0
    %537 = vmatpush1.msra.mxu0 %v520
    %538 = vmatprep.subr.mxu0 0.0
    %539 = vmatpush1.msra.mxu0 %v519
    %540 = vmatprep.subr.mxu0 0.0
    %541 = vmatpush1.msra.mxu0 %v518
    %542 = vmatprep.subr.mxu0 0.0
    %543 = vmatpush1.msra.mxu0 %v517
    %544 = vmatprep.subr.mxu0 0.0
    %545 = vmatpush1.msra.mxu0 %v516
    %546 = vmatprep.subr.mxu0 0.0
    %547 = vmatpush1.msra.mxu0 %v515
    %548 = vmatprep.subr.mxu0 0.0
    %549 = vmatpush1.msra.mxu0 %v514
    %550 = vmatprep.subr.mxu0 0.0
    %551 = vmatpush1.msra.mxu0 %v513
    %552 = vmatprep.subr.mxu0 0.0
    %553 = vmatpush1.msra.mxu0 %v512
    %554 = vmatprep.subr.mxu0 0.0
    %555 = vmatpush1.msra.mxu0 %v511
    %556 = vmatprep.subr.mxu0 0.0
    %557 = vmatpush1.msra.mxu0 %v510
    %558 = vmatprep.subr.mxu0 0.0
    %559 = vmatpush2.msra.mxu0 0.0
    %560 = vmatprep.subr.mxu0 0.0
    %561 = vmatpush2.msra.mxu0 0.0
    %562 = vmatprep.subr.mxu0 0.0
    %563 = vmatpush2.msra.mxu0 0.0
    %564 = vmatprep.subr.mxu0 0.0
    %565 = vmatpush2.msra.mxu0 0.0
    %566 = vmatprep.subr.mxu0 0.0
    %567 = vmatpush2.msra.mxu0 0.0
    %568 = vmatprep.subr.mxu0 0.0
    %569 = vmatpush2.msra.mxu0 0.0
    %570 = vmatprep.subr.mxu0 0.0
    %571 = vmatpush2.msra.mxu0 0.0
    %572 = vmatprep.subr.mxu0 0.0
    %573 = vmatpush2.msra.mxu0 0.0
    %574 = vmatprep.subr.mxu0 0.0
    %575 = vmatpush2.msra.mxu0 0.0
    %576 = vmatprep.subr.mxu0 0.0
    %577 = vmatpush2.msra.mxu0 0.0
    %578 = vmatprep.subr.mxu0 0.0
    %579 = vmatpush2.msra.mxu0 0.0
    %580 = vmatprep.subr.mxu0 0.0
    %581 = vmatpush2.msra.mxu0 0.0
    %582 = vmatprep.subr.mxu0 0.0
    %583 = vmatpush2.msra.mxu0 0.0
    %584 = vmatprep.subr.mxu0 0.0
    %585 = vmatpush2.msra.mxu0 0.0
    %586 = vmatprep.subr.mxu0 0.0
    %587 = vmatpush2.msra.mxu0 0.0
    %588 = vmatprep.subr.mxu0 0.0
    %589 = vmatpush2.msra.mxu0 0.0
    %590 = vmatprep.mubr.f32.mxu0 0.0
    %591 = vmatmul.mubr.f32.gmra.mxu0 %v489
    %v592 = vpop.f32.mrf.mxu0
    %v593 = vadd.f32 0.0, %v592
    %v594 = vpop.f32.mrf.mxu0
    %595 = vmatprep.mubr.f32.mxu0 0.0
    %596 = vmatmul.mubr.f32.gmra.mxu0 %v490
    %v597 = vpop.f32.mrf.mxu0
    %v598 = vadd.f32 0.0, %v597
    %v599 = vpop.f32.mrf.mxu0
    %600 = vmatprep.mubr.f32.mxu0 0.0
    %601 = vmatmul.mubr.f32.gmra.mxu0 %v491
    %v602 = vpop.f32.mrf.mxu0
    %v603 = vadd.f32 0.0, %v602
    %v604 = vpop.f32.mrf.mxu0
    %605 = vmatprep.mubr.f32.mxu0 0.0
    %606 = vmatmul.mubr.f32.gmra.mxu0 %v492
    %v607 = vpop.f32.mrf.mxu0
    %v608 = vadd.f32 0.0, %v607
    %v609 = vpop.f32.mrf.mxu0
    %610 = vdwg.mxu0
    %s611 = scalar_lea.vmem [#allocation8], 256
    %v612 = vld [vmem:[%s611] sm:$0xff]
    %v613 = vld [vmem:[%s611 + $0x8] sm:$0xff]
    %v614 = vld [vmem:[%s611 + $0x10] sm:$0xff]
    %v615 = vld [vmem:[%s611 + $0x18] sm:$0xff]
    %v616 = vld [vmem:[%s611 + $0x20] sm:$0xff]
    %v617 = vld [vmem:[%s611 + $0x28] sm:$0xff]
    %v618 = vld [vmem:[%s611 + $0x30] sm:$0xff]
    %v619 = vld [vmem:[%s611 + $0x38] sm:$0xff]
    %v620 = vld [vmem:[%s611 + $0x40] sm:$0xff]
    %v621 = vld [vmem:[%s611 + $0x48] sm:$0xff]
    %v622 = vld [vmem:[%s611 + $0x50] sm:$0xff]
    %v623 = vld [vmem:[%s611 + $0x58] sm:$0xff]
    %v624 = vld [vmem:[%s611 + $0x60] sm:$0xff]
    %v625 = vld [vmem:[%s611 + $0x68] sm:$0xff]
    %v626 = vld [vmem:[%s611 + $0x70] sm:$0xff]
    %v627 = vld [vmem:[%s611 + $0x78] sm:$0xff]
    %628 = vmatprep.subr.mxu0 0.0
    %629 = vmatpush1.msra.mxu0 %v627
    %630 = vmatprep.subr.mxu0 0.0
    %631 = vmatpush1.msra.mxu0 %v626
    %632 = vmatprep.subr.mxu0 0.0
    %633 = vmatpush1.msra.mxu0 %v625
    %634 = vmatprep.subr.mxu0 0.0
    %635 = vmatpush1.msra.mxu0 %v624
    %636 = vmatprep.subr.mxu0 0.0
    %637 = vmatpush1.msra.mxu0 %v623
    %638 = vmatprep.subr.mxu0 0.0
    %639 = vmatpush1.msra.mxu0 %v622
    %640 = vmatprep.subr.mxu0 0.0
    %641 = vmatpush1.msra.mxu0 %v621
    %642 = vmatprep.subr.mxu0 0.0
    %643 = vmatpush1.msra.mxu0 %v620
    %644 = vmatprep.subr.mxu0 0.0
    %645 = vmatpush1.msra.mxu0 %v619
    %646 = vmatprep.subr.mxu0 0.0
    %647 = vmatpush1.msra.mxu0 %v618
    %648 = vmatprep.subr.mxu0 0.0
    %649 = vmatpush1.msra.mxu0 %v617
    %650 = vmatprep.subr.mxu0 0.0
    %651 = vmatpush1.msra.mxu0 %v616
    %652 = vmatprep.subr.mxu0 0.0
    %653 = vmatpush1.msra.mxu0 %v615
    %654 = vmatprep.subr.mxu0 0.0
    %655 = vmatpush1.msra.mxu0 %v614
    %656 = vmatprep.subr.mxu0 0.0
    %657 = vmatpush1.msra.mxu0 %v613
    %658 = vmatprep.subr.mxu0 0.0
    %659 = vmatpush1.msra.mxu0 %v612
    %660 = vmatprep.subr.mxu0 0.0
    %661 = vmatpush2.msra.mxu0 0.0
    %662 = vmatprep.subr.mxu0 0.0
    %663 = vmatpush2.msra.mxu0 0.0
    %664 = vmatprep.subr.mxu0 0.0
    %665 = vmatpush2.msra.mxu0 0.0
    %666 = vmatprep.subr.mxu0 0.0
    %667 = vmatpush2.msra.mxu0 0.0
    %668 = vmatprep.subr.mxu0 0.0
    %669 = vmatpush2.msra.mxu0 0.0
    %670 = vmatprep.subr.mxu0 0.0
    %671 = vmatpush2.msra.mxu0 0.0
    %672 = vmatprep.subr.mxu0 0.0
    %673 = vmatpush2.msra.mxu0 0.0
    %674 = vmatprep.subr.mxu0 0.0
    %675 = vmatpush2.msra.mxu0 0.0
    %676 = vmatprep.subr.mxu0 0.0
    %677 = vmatpush2.msra.mxu0 0.0
    %678 = vmatprep.subr.mxu0 0.0
    %679 = vmatpush2.msra.mxu0 0.0
    %680 = vmatprep.subr.mxu0 0.0
    %681 = vmatpush2.msra.mxu0 0.0
    %682 = vmatprep.subr.mxu0 0.0
    %683 = vmatpush2.msra.mxu0 0.0
    %684 = vmatprep.subr.mxu0 0.0
    %685 = vmatpush2.msra.mxu0 0.0
    %686 = vmatprep.subr.mxu0 0.0
    %687 = vmatpush2.msra.mxu0 0.0
    %688 = vmatprep.subr.mxu0 0.0
    %689 = vmatpush2.msra.mxu0 0.0
    %690 = vmatprep.subr.mxu0 0.0
    %691 = vmatpush2.msra.mxu0 0.0
    %692 = vmatprep.mubr.f32.mxu0 0.0
    %693 = vmatmul.mubr.f32.gmra.mxu0 %v489
    %v694 = vpop.f32.mrf.mxu0
    %v695 = vadd.f32 0.0, %v694
    %v696 = vpop.f32.mrf.mxu0
    %697 = vmatprep.mubr.f32.mxu0 0.0
    %698 = vmatmul.mubr.f32.gmra.mxu0 %v490
    %v699 = vpop.f32.mrf.mxu0
    %v700 = vadd.f32 0.0, %v699
    %v701 = vpop.f32.mrf.mxu0
    %702 = vmatprep.mubr.f32.mxu0 0.0
    %703 = vmatmul.mubr.f32.gmra.mxu0 %v491
    %v704 = vpop.f32.mrf.mxu0
    %v705 = vadd.f32 0.0, %v704
    %v706 = vpop.f32.mrf.mxu0
    %707 = vmatprep.mubr.f32.mxu0 0.0
    %708 = vmatmul.mubr.f32.gmra.mxu0 %v492
    %v709 = vpop.f32.mrf.mxu0
    %v710 = vadd.f32 0.0, %v709
    %v711 = vpop.f32.mrf.mxu0
    %712 = vdwg.mxu0
    %v713 = vrot.slane %v593, 7
    %v714 = vrot.slane %v598, 7
    %v715 = vrot.slane %v603, 7
    %v716 = vrot.slane %v608, 7
    %v717 = vsel %vm349, %v715, %v716
    %v718 = vsel %vm349, %v714, %v715
    %v719 = vsel %vm349, %v713, %v714
    %v720 = vsel %vm349, %v716, %v713
    %v721 = vrot.slane %v695, 1
    %v722 = vrot.slane %v700, 1
    %v723 = vrot.slane %v705, 1
    %v724 = vrot.slane %v710, 1
    %v725 = vsel %vm358, %v723, %v724
    %v726 = vsel %vm358, %v722, %v723
    %v727 = vsel %vm358, %v721, %v722
    %v728 = vsel %vm358, %v724, %v721
    %v729 = vsel %vm367, 0.0, %v720
    %v730 = vsel %vm368, 0.0, %v719
    %v731 = vsel %vm369, 0.0, %v718
    %v732 = vsel %vm370, 0.0, %v717
    %733 = vmatprep.subr.mxu0 0.0
    %734 = vmatpush1.msra.mxu0 %v509
    %735 = vmatprep.subr.mxu0 0.0
    %736 = vmatpush1.msra.mxu0 %v508
    %737 = vmatprep.subr.mxu0 0.0
    %738 = vmatpush1.msra.mxu0 %v507
    %739 = vmatprep.subr.mxu0 0.0
    %740 = vmatpush1.msra.mxu0 %v506
    %741 = vmatprep.subr.mxu0 0.0
    %742 = vmatpush1.msra.mxu0 %v505
    %743 = vmatprep.subr.mxu0 0.0
    %744 = vmatpush1.msra.mxu0 %v504
    %745 = vmatprep.subr.mxu0 0.0
    %746 = vmatpush1.msra.mxu0 %v503
    %747 = vmatprep.subr.mxu0 0.0
    %748 = vmatpush1.msra.mxu0 %v502
    %749 = vmatprep.subr.mxu0 0.0
    %750 = vmatpush1.msra.mxu0 %v501
    %751 = vmatprep.subr.mxu0 0.0
    %752 = vmatpush1.msra.mxu0 %v500
    %753 = vmatprep.subr.mxu0 0.0
    %754 = vmatpush1.msra.mxu0 %v499
    %755 = vmatprep.subr.mxu0 0.0
    %756 = vmatpush1.msra.mxu0 %v498
    %757 = vmatprep.subr.mxu0 0.0
    %758 = vmatpush1.msra.mxu0 %v497
    %759 = vmatprep.subr.mxu0 0.0
    %760 = vmatpush1.msra.mxu0 %v496
    %761 = vmatprep.subr.mxu0 0.0
    %762 = vmatpush1.msra.mxu0 %v495
    %763 = vmatprep.subr.mxu0 0.0
    %764 = vmatpush1.msra.mxu0 %v494
    %765 = vmatprep.subr.mxu0 0.0
    %766 = vmatpush2.msra.mxu0 0.0
    %767 = vmatprep.subr.mxu0 0.0
    %768 = vmatpush2.msra.mxu0 0.0
    %769 = vmatprep.subr.mxu0 0.0
    %770 = vmatpush2.msra.mxu0 0.0
    %771 = vmatprep.subr.mxu0 0.0
    %772 = vmatpush2.msra.mxu0 0.0
    %773 = vmatprep.subr.mxu0 0.0
    %774 = vmatpush2.msra.mxu0 0.0
    %775 = vmatprep.subr.mxu0 0.0
    %776 = vmatpush2.msra.mxu0 0.0
    %777 = vmatprep.subr.mxu0 0.0
    %778 = vmatpush2.msra.mxu0 0.0
    %779 = vmatprep.subr.mxu0 0.0
    %780 = vmatpush2.msra.mxu0 0.0
    %781 = vmatprep.subr.mxu0 0.0
    %782 = vmatpush2.msra.mxu0 0.0
    %783 = vmatprep.subr.mxu0 0.0
    %784 = vmatpush2.msra.mxu0 0.0
    %785 = vmatprep.subr.mxu0 0.0
    %786 = vmatpush2.msra.mxu0 0.0
    %787 = vmatprep.subr.mxu0 0.0
    %788 = vmatpush2.msra.mxu0 0.0
    %789 = vmatprep.subr.mxu0 0.0
    %790 = vmatpush2.msra.mxu0 0.0
    %791 = vmatprep.subr.mxu0 0.0
    %792 = vmatpush2.msra.mxu0 0.0
    %793 = vmatprep.subr.mxu0 0.0
    %794 = vmatpush2.msra.mxu0 0.0
    %795 = vmatprep.subr.mxu0 0.0
    %796 = vmatpush2.msra.mxu0 0.0
    %797 = vmatprep.mubr.f32.mxu0 0.0
    %798 = vmatmul.mubr.f32.gmra.mxu0 %v489
    %v799 = vpop.f32.mrf.mxu0
    %v800 = vadd.f32 %v729, %v799
    %v801 = vpop.f32.mrf.mxu0
    %802 = vmatprep.mubr.f32.mxu0 0.0
    %803 = vmatmul.mubr.f32.gmra.mxu0 %v490
    %v804 = vpop.f32.mrf.mxu0
    %v805 = vadd.f32 %v730, %v804
    %v806 = vpop.f32.mrf.mxu0
    %807 = vmatprep.mubr.f32.mxu0 0.0
    %808 = vmatmul.mubr.f32.gmra.mxu0 %v491
    %v809 = vpop.f32.mrf.mxu0
    %v810 = vadd.f32 %v731, %v809
    %v811 = vpop.f32.mrf.mxu0
    %812 = vmatprep.mubr.f32.mxu0 0.0
    %813 = vmatmul.mubr.f32.gmra.mxu0 %v492
    %v814 = vpop.f32.mrf.mxu0
    %v815 = vadd.f32 %v732, %v814
    %v816 = vpop.f32.mrf.mxu0
    %817 = vdwg.mxu0
    %v818 = vsel %vm464, 0.0, %v727
    %v819 = vsel %vm465, 0.0, %v726
    %v820 = vsel %vm466, 0.0, %v725
    %v821 = vsel %vm467, 0.0, %v728
    %v822 = vadd.f32 %v800, %v818
    %v823 = vadd.f32 %v805, %v819
    %v824 = vadd.f32 %v810, %v820
    %v825 = vadd.f32 %v815, %v821
    %v826 = vld [vmem:[#allocation5 + $0x1] sm:$0x1]
    %v827 = vlaneseq
    %v828 = vshrl.u32 %v827, 7
    %v829 = vsub.s32 0, %v828
    %v830 = vrot.slane %v826, %v829
    %v831 = vadd.f32 %v822, %v830
    %v832 = vadd.f32 %v823, %v830
    %v833 = vadd.f32 %v824, %v830
    %v834 = vadd.f32 %v825, %v830
    %v835 = vmul.f32 %v831, 0.01
    %v836 = vmul.f32 %v832, 0.01
    %v837 = vmul.f32 %v833, 0.01
    %v838 = vmul.f32 %v834, 0.01
    %v839 = vmax.f32 %v831, %v835
    %v840 = vmax.f32 %v832, %v836
    %v841 = vmax.f32 %v833, %v837
    %v842 = vmax.f32 %v834, %v838
    %843 = vst [vmem:[#allocation10] sm:$0xff] %v839
    %844 = vst [vmem:[#allocation10 + $0x8] sm:$0xff] %v840
    %845 = vst [vmem:[#allocation10 + $0x10] sm:$0xff] %v841
    %846 = vst [vmem:[#allocation10 + $0x18] sm:$0xff] %v842
    // Predicated region
    $region34: #{tpu_custom_call.1} parent=1 // pred_check
      _
    $region35: #{tpu_custom_call.1} parent=1 // pred_check_branch
      %848 = sbr.rel (0) target = $region37
    $region36: #{tpu_custom_call.1} parent=1 // pred_region
      %s850 = ssub.s32 512, 512
      %851 = vsyncadd [#allocation4], %s850
      %s852 = sshll.u32 [#allocation10], 4
      %s853 = int_to_ptr.vmem [resolvable:$true] %s852
      %858 = dma.vmem_to_hbm [thread:$0]  %s853, 512, %s4, [#allocation4], 128, 128, 8
    $region37: #{tpu_custom_call.1} parent=1 // pred_fallthru
      _
    // Predicated region
    $region38: #{tpu_custom_call.1} parent=1 // pred_check
      _
    $region39: #{tpu_custom_call.1} parent=1 // pred_check_branch
      %860 = sbr.rel (0) target = $region41
    $region40: #{tpu_custom_call.1} parent=1 // pred_region
      %861 = dma.done [#allocation4], 512
    $region41: #{tpu_custom_call.1} parent=1 // pred_fallthru
      _
    %862 = vsyncpa [#allocation3], 1
    %863 = vsyncpa [#allocation6], 1
    %864 = vsyncpa [#allocation9], 1
    %865 = vsyncpa [#allocation4], 1

</llo_original>
